<compile_context>
chip_gen: v5e
topology: v5e:2x2
jax: 0.10.0
libtpu: 0.0.40
codegen_flags: <defaults>
</compile_context>

<pallas_src>
import jax
import jax.numpy as jnp
from jax.experimental import pallas as pl
from jax.experimental.pallas import tpu as pltpu


def _round_up(x: int, m: int) -> int:
    return -(-x // m) * m


def _use_bf16_tanh() -> bool:
    """bf16 EUP exists on v6e/v7x; keep the f32 tanh path on v5e and older."""
    try:
        kind = jax.devices()[0].device_kind.lower()
    except Exception:
        return False
    return not any(v in kind for v in ("v2", "v3", "v4", "v5"))


def _choose_batch_tiling(B: int, batch_tile: int):
    """Pick (tb, b_pad, num_tiles): tb a multiple of 16 (bf16 output sublanes), minimal
    batch padding, and >= 2 grid steps at medium/large B so the parallel batch axis can
    shard across both v7x TensorCores (free on 1-TC v5e/v6e)."""
    batch_tile = max(16, _round_up(batch_tile, 16))
    num_tiles = -(-B // batch_tile)
    if num_tiles == 1 and B >= 256:
        num_tiles = 2
    tb = _round_up(-(-B // num_tiles), 16)
    return tb, tb * num_tiles, num_tiles


def make_mlp_policy_kernel(n_layers: int, d_pad: int, ob_dim: int,
                           n_bias_rows: int, bf16_tanh: bool):
    """Ref layout:
         obs_ref  [tb, ob_dim]                        f32 (unpadded lanes)
         wb_ref   [n_linear*d_pad + n_bias_rows, 128] bf16 (weight blocks + bias block)
         mean_ref [tb, 128]                           bf16 (lane-dense mean slab)
    """
    n_linear = n_layers + 1
    bias_base = n_linear * d_pad

    def kernel(obs_ref, wb_ref, mean_ref):
        # Bias block: 128-aligned start, 16-row aligned size, loaded once, upcast to f32.
        b_all = wb_ref[bias_base:bias_base + n_bias_rows, :].astype(jnp.float32)

        h = obs_ref[...].astype(jnp.bfloat16)      # in-kernel cast; MXU-native operand
        in_rows = ob_dim                           # layer-0 contraction width (unpadded)
        for i in range(n_layers):
            w = wb_ref[i * d_pad:i * d_pad + in_rows, :]          # bf16, static slice
            acc = jnp.dot(h, w, preferred_element_type=jnp.float32)
            z = acc + b_all[i:i + 1, :]
            if bf16_tanh:
                h = jnp.tanh(z.astype(jnp.bfloat16))   # bf16 EUP (v6e / v7x)
            else:
                h = jnp.tanh(z).astype(jnp.bfloat16)   # f32 EUP (v5e and older)
            in_rows = d_pad
        # Output layer: Linear (identity activation), f32 accumulate, bf16 store.
        w = wb_ref[n_layers * d_pad:n_layers * d_pad + in_rows, :]
        out = (jnp.dot(h, w, preferred_element_type=jnp.float32)
               + b_all[n_layers:n_layers + 1, :])
        mean_ref[...] = out.astype(mean_ref.dtype)

    return kernel


def pack_params(weights, biases, d_pad, n_bias_rows):
    """One bf16 slab: per-layer [d_pad, d_pad] zero-padded weight blocks stacked along
    sublanes, followed by a 16-row-aligned [n_bias_rows, d_pad] bias block."""
    blocks = []
    for w in weights:
        d_in, d_out = w.shape
        blocks.append(jnp.zeros((d_pad, d_pad), jnp.float32).at[:d_in, :d_out].set(w))
    bias_block = jnp.zeros((n_bias_rows, d_pad), jnp.float32)
    for i, b in enumerate(biases):
        bias_block = bias_block.at[i, :b.shape[0]].set(b)
    slab = jnp.concatenate(blocks + [bias_block], axis=0)
    return slab.astype(jnp.bfloat16)


def mlp_policy_forward(obs, weights, biases, logstd, *, batch_tile=1024):
    """Fused MLPPolicy forward.

    obs:     [B, ob_dim] float32
    weights: list of [in, out] float32 arrays (len = n_layers + 1; transpose of torch)
    biases:  list of [out] float32 arrays
    logstd:  [ac_dim] float32
    Returns (mean [B, ac_dim] f32, std [B, ac_dim] f32) -- the Normal's parameters.
    """
    n_layers = len(weights) - 1
    n_linear = n_layers + 1
    obs = obs.astype(jnp.float32)
    B, ob_dim = obs.shape
    ac_dim = weights[-1].shape[1]

    dims = [ob_dim] + [w.shape[1] for w in weights]
    d_pad = _round_up(max(dims + [128]), 128)        # lane-dense feature width (keep 128)
    n_bias_rows = _round_up(n_linear, 16)            # bf16-aligned bias block

    tb, b_pad, num_tiles = _choose_batch_tiling(B, batch_tile)

    # Batch-pad the (lane-unpadded) f32 obs only when needed; no wrapper cast pass.
    obs_p = obs if b_pad == B else jnp.zeros((b_pad, ob_dim), jnp.float32).at[:B].set(obs)

    slab = pack_params(weights, biases, d_pad, n_bias_rows)
    n_rows = n_linear * d_pad + n_bias_rows

    kernel = make_mlp_policy_kernel(n_layers, d_pad, ob_dim, n_bias_rows,
                                    _use_bf16_tanh())

    flops = 2 * b_pad * d_pad * (ob_dim + (n_linear - 1) * d_pad)
    transcendentals = b_pad * n_layers * d_pad
    bytes_accessed = obs_p.size * 4 + slab.size * 2 + b_pad * d_pad * 2

    # Double-buffered obs/mean tiles + resident slab; only raise the scoped-VMEM limit
    # when a very large batch_tile would brush v5e's 16 MiB scoped default.
    vmem_need = 2 * (tb * ob_dim * 4 + tb * d_pad * 2) + 2 * n_rows * d_pad * 2
    cp_kwargs = dict(dimension_semantics=("parallel",))
    if vmem_need > (12 << 20):
        cp_kwargs["vmem_limit_bytes"] = int(min(2 * vmem_need, 100 << 20))

    mean_p = pl.pallas_call(
        kernel,
        out_shape=jax.ShapeDtypeStruct((b_pad, d_pad), jnp.bfloat16),
        grid=(num_tiles,),
        in_specs=[
            pl.BlockSpec((tb, ob_dim), lambda i: (i, 0)),      # obs: batch-tiled, unpadded lanes
            pl.BlockSpec((n_rows, d_pad), lambda i: (0, 0)),   # params: resident, single DMA
        ],
        out_specs=pl.BlockSpec((tb, d_pad), lambda i: (i, 0)),  # lane-dense bf16 mean slab
        compiler_params=pltpu.CompilerParams(**cp_kwargs),
        cost_estimate=pl.CostEstimate(flops=flops,
                                      transcendentals=transcendentals,
                                      bytes_accessed=bytes_accessed),
    )(obs_p, slab)

    # TODO(synk): in production, keep downstream math on the padded bf16 slab (or fuse this
    # slice into the consumer) instead of re-materializing [B, ac_dim] here.
    mean = mean_p[:B, :ac_dim].astype(jnp.float32)
    # act_std = ones_like(act_mean) * exp(logstd): lazy broadcast, no kernel traffic.
    std = jnp.broadcast_to(jnp.exp(logstd), mean.shape)
    return mean, std


def init_params(key, ob_dim, ac_dim, n_layers, size):
    """Deterministic init mimicking nn.Linear uniform(-1/sqrt(fan_in), +1/sqrt(fan_in))."""
    dims = [ob_dim] + [size] * n_layers + [ac_dim]
    weights, biases = [], []
    for i in range(len(dims) - 1):
        fan_in, fan_out = dims[i], dims[i + 1]
        key, kw, kb = jax.random.split(key, 3)
        bound = 1.0 / jnp.sqrt(jnp.float32(fan_in))
        weights.append(jax.random.uniform(kw, (fan_in, fan_out), jnp.float32, -bound, bound))
        biases.append(jax.random.uniform(kb, (fan_out,), jnp.float32, -bound, bound))
    logstd = jnp.zeros((ac_dim,), jnp.float32)   # matches nn.Parameter(torch.zeros(ac_dim))
    return weights, biases, logstd


def reference_forward(obs, weights, biases, logstd):
    h = obs
    for w, b in zip(weights[:-1], biases[:-1]):
        h = jnp.tanh(h @ w + b)
    mean = h @ weights[-1] + biases[-1]
    std = jnp.broadcast_to(jnp.exp(logstd), mean.shape)
    return mean, std


if __name__ == "__main__":
    # Small shapes consistent with MLPPolicy (continuous / non-discrete branch).
    B = 8
    ob_dim = 16
    ac_dim = 4
    n_layers = 2
    size = 32

    key = jax.random.PRNGKey(0)
    key, k_obs = jax.random.split(key)
    obs = jax.random.normal(k_obs, (B, ob_dim), jnp.float32)

    weights, biases, logstd = init_params(key, ob_dim, ac_dim, n_layers, size)

    mean, std = mlp_policy_forward(obs, weights, biases, logstd)
    jax.block_until_ready((mean, std))

    # Sanity check vs. a pure-f32 JAX reference (looser tolerance: bf16 matmul operands,
    # bf16 bias/output storage).
    ref_mean, ref_std = reference_forward(obs, weights, biases, logstd)
    assert jnp.allclose(mean, ref_mean, atol=5e-2, rtol=5e-2), "mean mismatch"
    assert jnp.allclose(std, ref_std, atol=1e-6, rtol=1e-6), "std mismatch"

    # TODO(synk): torch.distributions.Normal construction and dist.sample() are host-side
    # stochastic ops; the kernel produces the (mean, std) parameters of that distribution.
    print("KERNEL_OK")
</pallas_src>

<mosaic_0001>
module attributes {stable_mosaic.version = 11 : i64} {
  func.func @kernel(%arg0: i32, %arg1: memref<16x16xf32, #tpu.memory_space<vmem>>, %arg2: memref<400x128xbf16, #tpu.memory_space<vmem>>, %arg3: memref<16x128xbf16, #tpu.memory_space<vmem>>) attributes {dimension_semantics = [#tpu.dimension_semantics<parallel>], iteration_bounds = array<i64: 1>, scalar_prefetch = 0 : i64, scratch_operands = 0 : i64, tpu.core_type = #tpu.core_type<tc>, window_params = [{transform_indices = @transform_0, window_bounds = array<i64: 16, 16>}, {pipeline_mode = #tpu.pipeline_mode<synchronous>, transform_indices = @transform_1, window_bounds = array<i64: 400, 128>}, {transform_indices = @transform_2, window_bounds = array<i64: 16, 128>}]} {
    %c384 = arith.constant 384 : index
    %c0 = arith.constant 0 : index
    %0 = vector.load %arg2[%c384, %c0] : memref<400x128xbf16, #tpu.memory_space<vmem>>, vector<16x128xbf16>
    %1 = arith.extf %0 : vector<16x128xbf16> to vector<16x128xf32>
    %c0_0 = arith.constant 0 : index
    %c0_1 = arith.constant 0 : index
    %2 = vector.load %arg1[%c0_0, %c0_1] : memref<16x16xf32, #tpu.memory_space<vmem>>, vector<16x16xf32>
    %3 = arith.truncf %2 : vector<16x16xf32> to vector<16x16xbf16>
    %c0_2 = arith.constant 0 : index
    %c0_3 = arith.constant 0 : index
    %4 = vector.load %arg2[%c0_2, %c0_3] : memref<400x128xbf16, #tpu.memory_space<vmem>>, vector<16x128xbf16>
    %cst = arith.constant dense<0.000000e+00> : vector<16x128xf32>
    %5 = tpu.matmul %3, %4, %cst {dimension_numbers = #tpu.dot_dimension_numbers<[1], [0], [0], [1], [0, 0, 1, 1], [], []>} : vector<16x16xbf16>, vector<16x128xbf16>, vector<16x128xf32> -> vector<16x128xf32>
    %6 = vector.extract_strided_slice %1 {offsets = [0, 0], sizes = [1, 128], strides = [1, 1]} : vector<16x128xf32> to vector<1x128xf32>
    %7 = vector.broadcast %6 : vector<1x128xf32> to vector<16x128xf32>
    %8 = arith.addf %5, %7 : vector<16x128xf32>
    %9 = arith.truncf %8 : vector<16x128xf32> to vector<16x128xbf16>
    %10 = math.tanh %9 : vector<16x128xbf16>
    %c128 = arith.constant 128 : index
    %c0_4 = arith.constant 0 : index
    %11 = vector.load %arg2[%c128, %c0_4] : memref<400x128xbf16, #tpu.memory_space<vmem>>, vector<128x128xbf16>
    %cst_5 = arith.constant dense<0.000000e+00> : vector<16x128xf32>
    %12 = tpu.matmul %10, %11, %cst_5 {dimension_numbers = #tpu.dot_dimension_numbers<[1], [0], [0], [1], [0, 0, 1, 1], [], []>} : vector<16x128xbf16>, vector<128x128xbf16>, vector<16x128xf32> -> vector<16x128xf32>
    %13 = vector.extract_strided_slice %1 {offsets = [1, 0], sizes = [1, 128], strides = [1, 1]} : vector<16x128xf32> to vector<1x128xf32>
    %14 = vector.broadcast %13 : vector<1x128xf32> to vector<16x128xf32>
    %15 = arith.addf %12, %14 : vector<16x128xf32>
    %16 = arith.truncf %15 : vector<16x128xf32> to vector<16x128xbf16>
    %17 = math.tanh %16 : vector<16x128xbf16>
    %c256 = arith.constant 256 : index
    %c0_6 = arith.constant 0 : index
    %18 = vector.load %arg2[%c256, %c0_6] : memref<400x128xbf16, #tpu.memory_space<vmem>>, vector<128x128xbf16>
    %cst_7 = arith.constant dense<0.000000e+00> : vector<16x128xf32>
    %19 = tpu.matmul %17, %18, %cst_7 {dimension_numbers = #tpu.dot_dimension_numbers<[1], [0], [0], [1], [0, 0, 1, 1], [], []>} : vector<16x128xbf16>, vector<128x128xbf16>, vector<16x128xf32> -> vector<16x128xf32>
    %20 = vector.extract_strided_slice %1 {offsets = [2, 0], sizes = [1, 128], strides = [1, 1]} : vector<16x128xf32> to vector<1x128xf32>
    %21 = vector.broadcast %20 : vector<1x128xf32> to vector<16x128xf32>
    %22 = arith.addf %19, %21 : vector<16x128xf32>
    %23 = arith.truncf %22 : vector<16x128xf32> to vector<16x128xbf16>
    %c0_8 = arith.constant 0 : index
    %c0_9 = arith.constant 0 : index
    %24 = vector.load %arg3[%c0_8, %c0_9] : memref<16x128xbf16, #tpu.memory_space<vmem>>, vector<16x128xbf16>
    tpu.vector_store %arg3[%c0_8, %c0_9], %23 {strides = array<i32>} : memref<16x128xbf16, #tpu.memory_space<vmem>>, vector<16x128xbf16>,
    return
  }
  func.func @transform_0(%arg0: i32) -> (i32, i32) {
    %c0_i32 = arith.constant 0 : i32
    %c0_i32_0 = arith.constant 0 : i32
    return %arg0, %c0_i32 : i32, i32
  }
  func.func @transform_1(%arg0: i32) -> (i32, i32) {
    %c0_i32 = arith.constant 0 : i32
    %c0_i32_0 = arith.constant 0 : i32
    %c0_i32_1 = arith.constant 0 : i32
    return %c0_i32, %c0_i32_0 : i32, i32
  }
  func.func @transform_2(%arg0: i32) -> (i32, i32) {
    %c0_i32 = arith.constant 0 : i32
    %c0_i32_0 = arith.constant 0 : i32
    return %arg0, %c0_i32 : i32, i32
  }
}

</mosaic_0001>

<llo_original>
// kernel: tpu_custom_call.1
$region0: #{tpu_custom_call.1}
  #allocation0 [shape = 'u32[]', space=smem, size = 0x4, offset = 0x4, fixed_abs, tag = 'smem constant byte address 0x4 - core index']
  #allocation1 [shape = 'u32[72,128]{1,0:T(1,128)}', space=vmem, size = 0x9000, scoped, tag = 'internal scratch']
  %s0 = inlined_call_operand.hbm [shape: f32[16,16], index: 0, kind: input, shape index: {}]
  %s1 = inlined_call_operand.hbm [shape: bf16[400,128], index: 1, kind: input, shape index: {}]
  %s2 = inlined_call_operand.hbm [shape: bf16[16,128], index: 2, kind: output, shape index: {}]
  %s3 = sld [smem:[#allocation0]]
  $region26: #{tpu_custom_call.1} parent=0
    _
  %s5 = ssub.s32 1, %s3
  %s6 = scalar_select 0, %s5, %s3
  $region1: #{tpu_custom_call.1} parent=0
    #allocation2 [shape = 'u8[8192]{0}', space=vmem, size = 0x2000, scoped, tag = 'input window, operand 0, single buffered']
    #allocation3 [shape = 's32[1]{0}', space=sflag, size = 0x4, scoped, tag = 'scoped memory for tpu_custom_call.1']
    #allocation4 [shape = 's32[1]{0}', space=sflag, size = 0x4, scoped, tag = 'scoped memory for tpu_custom_call.1']
    #allocation5 [shape = 'u8[102400]{0}', space=vmem, size = 0x19000, scoped, tag = 'input window, operand 1, single buffered']
    #allocation6 [shape = 's32[1]{0}', space=sflag, size = 0x4, scoped, tag = 'scoped memory for tpu_custom_call.1']
    #allocation7 [shape = 'u8[4096]{0}', space=vmem, size = 0x1000, scoped, tag = 'output window, operand 0, single buffered']
    %7 = vsyncpa [#allocation3], 0
    %8 = vsyncpa [#allocation6], 0
    %9 = vsyncpa [#allocation4], 0
    // Predicated region
    $region2: #{tpu_custom_call.1} parent=1 // pred_check
      _
    $region3: #{tpu_custom_call.1} parent=1 // pred_check_branch
      %11 = sbr.rel (0) target = $region5
    $region4: #{tpu_custom_call.1} parent=1 // pred_region
      %13 = vsyncadd [#allocation3], 0
      %s14 = sshll.u32 %s0, 4
      %s15 = int_to_ptr.hbm [resolvable:$true] %s14
      %s16 = sshll.u32 [#allocation2], 4
      %s17 = int_to_ptr.vmem [resolvable:$true] %s16
      %22 = dma.hbm_to_vmem [thread:$0]  %s15, 256, %s17, [#allocation3], 128, 128, 8
    $region5: #{tpu_custom_call.1} parent=1 // pred_fallthru
      _
    // Predicated region
    $region6: #{tpu_custom_call.1} parent=1 // pred_check
      _
    $region7: #{tpu_custom_call.1} parent=1 // pred_check_branch
      %24 = sbr.rel (0) target = $region9
    $region8: #{tpu_custom_call.1} parent=1 // pred_region
      %26 = vsyncadd [#allocation6], 0
      %s27 = sshll.u32 %s1, 4
      %s28 = int_to_ptr.hbm [resolvable:$true] %s27
      %s29 = sshll.u32 [#allocation5], 4
      %s30 = int_to_ptr.vmem [resolvable:$true] %s29
      %35 = dma.hbm_to_vmem [thread:$0]  %s28, 3200, %s30, [#allocation6], 64, 64, 4
    $region9: #{tpu_custom_call.1} parent=1 // pred_fallthru
      _
    // Predicated region
    $region10: #{tpu_custom_call.1} parent=1 // pred_check
      _
    $region11: #{tpu_custom_call.1} parent=1 // pred_check_branch
      %37 = sbr.rel (0) target = $region13
    $region12: #{tpu_custom_call.1} parent=1 // pred_region
      %39 = dma.done [#allocation3], 256
    $region13: #{tpu_custom_call.1} parent=1 // pred_fallthru
      _
    // Predicated region
    $region14: #{tpu_custom_call.1} parent=1 // pred_check
      _
    $region15: #{tpu_custom_call.1} parent=1 // pred_check_branch
      %41 = sbr.rel (0) target = $region17
    $region16: #{tpu_custom_call.1} parent=1 // pred_region
      %43 = dma.done [#allocation6], 3200
    $region17: #{tpu_custom_call.1} parent=1 // pred_fallthru
      _
    %v45 = vld [vmem:[#allocation5 + $0xc0] sm:$0xf]
    %v46 = vunpack.c.l.bf16 %v45
    %v47 = vld [vmem:[#allocation2] sm:$0xff]
    %v48 = vld [vmem:[#allocation2 + $0x8] sm:$0xff]
    %v49 = vpack.c.bf16 %v48, %v47
    %v50 = vld [vmem:[#allocation5] sm:$0xf]
    %v51 = vld [vmem:[#allocation5 + $0x4] sm:$0xf]
    %v52 = vperm.slane %v46, 0
    %v55 = vunpack.c.l.b16 %v50
    %v56 = vunpack.c.l.b16 %v51
    %v57 = vpack.c.b16 %v56, %v55
    %vm59 = vcmask 130048
    %v61 = vsel %vm59, %v49, 0
    %63 = vmatpush.bf16.msra.mxu0 0
    %64 = vmatpush.bf16.msra.mxu0 0
    %65 = vmatpush.bf16.msra.mxu0 0
    %66 = vmatpush.bf16.msra.mxu0 0
    %67 = vmatpush.bf16.msra.mxu0 0
    %68 = vmatpush.bf16.msra.mxu0 0
    %69 = vmatpush.bf16.msra.mxu0 0
    %70 = vmatpush.bf16.msra.mxu0 %v57
    %71 = vmatmul.bf16.gmra.mxu0 %v61
    %v72 = vpop.f32.mrf.mxu0
    %v73 = vadd.f32 %v52, %v72
    %v74 = vpop.f32.mrf.mxu0
    %v75 = vadd.f32 %v52, %v74
    %76 = vdwg.mxu0
    %v77 = vpack.c.bf16 %v75, %v73
    %v78 = vunpack.c.l.bf16 %v77
    %v79 = vunpack.c.h.bf16 %v77
    %v80 = vtanh.pop %v78
    %v81 = vtanh.pop %v79
    %v82 = vpack.c.bf16 %v81, %v80
    %v83 = vld [vmem:[#allocation5 + $0x40] sm:$0xf]
    %v84 = vld [vmem:[#allocation5 + $0x44] sm:$0xf]
    %v85 = vld [vmem:[#allocation5 + $0x48] sm:$0xf]
    %v86 = vld [vmem:[#allocation5 + $0x4c] sm:$0xf]
    %v87 = vld [vmem:[#allocation5 + $0x50] sm:$0xf]
    %v88 = vld [vmem:[#allocation5 + $0x54] sm:$0xf]
    %v89 = vld [vmem:[#allocation5 + $0x58] sm:$0xf]
    %v90 = vld [vmem:[#allocation5 + $0x5c] sm:$0xf]
    %v91 = vld [vmem:[#allocation5 + $0x60] sm:$0xf]
    %v92 = vld [vmem:[#allocation5 + $0x64] sm:$0xf]
    %v93 = vld [vmem:[#allocation5 + $0x68] sm:$0xf]
    %v94 = vld [vmem:[#allocation5 + $0x6c] sm:$0xf]
    %v95 = vld [vmem:[#allocation5 + $0x70] sm:$0xf]
    %v96 = vld [vmem:[#allocation5 + $0x74] sm:$0xf]
    %v97 = vld [vmem:[#allocation5 + $0x78] sm:$0xf]
    %v98 = vld [vmem:[#allocation5 + $0x7c] sm:$0xf]
    %v99 = vperm.slane %v46, 1
    %v116 = vunpack.c.l.b16 %v83
    %v117 = vunpack.c.l.b16 %v84
    %v118 = vunpack.c.l.b16 %v85
    %v119 = vunpack.c.l.b16 %v86
    %v120 = vunpack.c.l.b16 %v87
    %v121 = vunpack.c.l.b16 %v88
    %v122 = vunpack.c.l.b16 %v89
    %v123 = vunpack.c.l.b16 %v90
    %v124 = vunpack.c.l.b16 %v91
    %v125 = vunpack.c.l.b16 %v92
    %v126 = vunpack.c.l.b16 %v93
    %v127 = vunpack.c.l.b16 %v94
    %v128 = vunpack.c.l.b16 %v95
    %v129 = vunpack.c.l.b16 %v96
    %v130 = vunpack.c.l.b16 %v97
    %v131 = vunpack.c.l.b16 %v98
    %v132 = vpack.c.b16 %v117, %v116
    %v133 = vpack.c.b16 %v119, %v118
    %v134 = vpack.c.b16 %v121, %v120
    %v135 = vpack.c.b16 %v123, %v122
    %v136 = vpack.c.b16 %v125, %v124
    %v137 = vpack.c.b16 %v127, %v126
    %v138 = vpack.c.b16 %v129, %v128
    %v139 = vpack.c.b16 %v131, %v130
    %148 = vmatpush.bf16.msra.mxu0 %v139
    %149 = vmatpush.bf16.msra.mxu0 %v138
    %150 = vmatpush.bf16.msra.mxu0 %v137
    %151 = vmatpush.bf16.msra.mxu0 %v136
    %152 = vmatpush.bf16.msra.mxu0 %v135
    %153 = vmatpush.bf16.msra.mxu0 %v134
    %154 = vmatpush.bf16.msra.mxu0 %v133
    %155 = vmatpush.bf16.msra.mxu0 %v132
    %156 = vmatmul.bf16.gmra.mxu0 %v82
    %v157 = vpop.f32.mrf.mxu0
    %v158 = vadd.f32 %v99, %v157
    %v159 = vpop.f32.mrf.mxu0
    %v160 = vadd.f32 %v99, %v159
    %161 = vdwg.mxu0
    %v162 = vpack.c.bf16 %v160, %v158
    %v163 = vunpack.c.l.bf16 %v162
    %v164 = vunpack.c.h.bf16 %v162
    %v165 = vtanh.pop %v163
    %v166 = vtanh.pop %v164
    %v167 = vpack.c.bf16 %v166, %v165
    %v168 = vld [vmem:[#allocation5 + $0x80] sm:$0xf]
    %v169 = vld [vmem:[#allocation5 + $0x84] sm:$0xf]
    %v170 = vld [vmem:[#allocation5 + $0x88] sm:$0xf]
    %v171 = vld [vmem:[#allocation5 + $0x8c] sm:$0xf]
    %v172 = vld [vmem:[#allocation5 + $0x90] sm:$0xf]
    %v173 = vld [vmem:[#allocation5 + $0x94] sm:$0xf]
    %v174 = vld [vmem:[#allocation5 + $0x98] sm:$0xf]
    %v175 = vld [vmem:[#allocation5 + $0x9c] sm:$0xf]
    %v176 = vld [vmem:[#allocation5 + $0xa0] sm:$0xf]
    %v177 = vld [vmem:[#allocation5 + $0xa4] sm:$0xf]
    %v178 = vld [vmem:[#allocation5 + $0xa8] sm:$0xf]
    %v179 = vld [vmem:[#allocation5 + $0xac] sm:$0xf]
    %v180 = vld [vmem:[#allocation5 + $0xb0] sm:$0xf]
    %v181 = vld [vmem:[#allocation5 + $0xb4] sm:$0xf]
    %v182 = vld [vmem:[#allocation5 + $0xb8] sm:$0xf]
    %v183 = vld [vmem:[#allocation5 + $0xbc] sm:$0xf]
    %v184 = vperm.slane %v46, 2
    %v201 = vunpack.c.l.b16 %v168
    %v202 = vunpack.c.l.b16 %v169
    %v203 = vunpack.c.l.b16 %v170
    %v204 = vunpack.c.l.b16 %v171
    %v205 = vunpack.c.l.b16 %v172
    %v206 = vunpack.c.l.b16 %v173
    %v207 = vunpack.c.l.b16 %v174
    %v208 = vunpack.c.l.b16 %v175
    %v209 = vunpack.c.l.b16 %v176
    %v210 = vunpack.c.l.b16 %v177
    %v211 = vunpack.c.l.b16 %v178
    %v212 = vunpack.c.l.b16 %v179
    %v213 = vunpack.c.l.b16 %v180
    %v214 = vunpack.c.l.b16 %v181
    %v215 = vunpack.c.l.b16 %v182
    %v216 = vunpack.c.l.b16 %v183
    %v217 = vpack.c.b16 %v202, %v201
    %v218 = vpack.c.b16 %v204, %v203
    %v219 = vpack.c.b16 %v206, %v205
    %v220 = vpack.c.b16 %v208, %v207
    %v221 = vpack.c.b16 %v210, %v209
    %v222 = vpack.c.b16 %v212, %v211
    %v223 = vpack.c.b16 %v214, %v213
    %v224 = vpack.c.b16 %v216, %v215
    %233 = vmatpush.bf16.msra.mxu0 %v224
    %234 = vmatpush.bf16.msra.mxu0 %v223
    %235 = vmatpush.bf16.msra.mxu0 %v222
    %236 = vmatpush.bf16.msra.mxu0 %v221
    %237 = vmatpush.bf16.msra.mxu0 %v220
    %238 = vmatpush.bf16.msra.mxu0 %v219
    %239 = vmatpush.bf16.msra.mxu0 %v218
    %240 = vmatpush.bf16.msra.mxu0 %v217
    %241 = vmatmul.bf16.gmra.mxu0 %v167
    %v242 = vpop.f32.mrf.mxu0
    %v243 = vadd.f32 %v184, %v242
    %v244 = vpop.f32.mrf.mxu0
    %v245 = vadd.f32 %v184, %v244
    %246 = vdwg.mxu0
    %v247 = vpack.c.bf16 %v243, %v243
    %v248 = vpack.c.bf16 %v245, %v245
    %249 = vst [vmem:[#allocation7] sm:$0xf] %v247
    %250 = vst [vmem:[#allocation7 + $0x4] sm:$0xf] %v248
    // Predicated region
    $region18: #{tpu_custom_call.1} parent=1 // pred_check
      _
    $region19: #{tpu_custom_call.1} parent=1 // pred_check_branch
      %252 = sbr.rel (0) target = $region21
    $region20: #{tpu_custom_call.1} parent=1 // pred_region
      %254 = vsyncadd [#allocation4], 0
      %s255 = sshll.u32 [#allocation7], 4
      %s256 = int_to_ptr.vmem [resolvable:$true] %s255
      %s257 = sshll.u32 %s2, 4
      %s258 = int_to_ptr.hbm [resolvable:$true] %s257
      %263 = dma.vmem_to_hbm [thread:$0]  %s256, 128, %s258, [#allocation4], 64, 64, 4
    $region21: #{tpu_custom_call.1} parent=1 // pred_fallthru
      _
    // Predicated region
    $region22: #{tpu_custom_call.1} parent=1 // pred_check
      _
    $region23: #{tpu_custom_call.1} parent=1 // pred_check_branch
      %265 = sbr.rel (0) target = $region25
    $region24: #{tpu_custom_call.1} parent=1 // pred_region
      %267 = dma.done [#allocation4], 128
    $region25: #{tpu_custom_call.1} parent=1 // pred_fallthru
      _
    %268 = vsyncpa [#allocation3], 1
    %269 = vsyncpa [#allocation6], 1
    %270 = vsyncpa [#allocation4], 1

</llo_original>
